<compile_context>
chip_gen: v6e
topology: v6e:2x2x1
jax: 0.10.0
libtpu: 0.0.40
codegen_flags: <defaults>
</compile_context>

<pallas_src>
import jax
import jax.numpy as jnp
from jax.experimental import pallas as pl
from jax.experimental.pallas import tpu as pltpu


_COMPILER_PARAMS = pltpu.CompilerParams(
    dimension_semantics=("arbitrary",),   # single grid step; nothing to shard
    vmem_limit_bytes=8 * 1024 * 1024,     # live footprint is <1 MiB; headroom
)


def _fullblock(shape, with_prefetch=False):
    """BlockSpec covering the whole array in the single grid step."""
    idx = (0,) * len(shape)
    if with_prefetch:
        return pl.BlockSpec(shape, lambda i, mat: idx)
    return pl.BlockSpec(shape, lambda i: idx)


# ----------------------------------------------------------------------------
# Shared in-kernel CNN stem stand-in, fully feature-major:
#   x_ref   : (Cin, B*HW)  — whole batch, HW on the lane axis
#   wct_ref : (F, Cin)     — 1x1 conv weight, (out, in)
#   bc_ref  : (F, 1)       — conv bias
#   pool_ref: (B*HW, B)    — block-diagonal 1/HW matrix (avg-pool as a matmul)
#   returns feats_t (F, B) f32, entirely in registers/VMEM.
# ----------------------------------------------------------------------------
def _stem_features_t(x_ref, wct_ref, bc_ref, pool_ref):
    # One MXU push for the whole batch (K=Cin).  On v5e/v6e a 3-step VPU
    # broadcast-MAC over channels would also work; MXU kept for simplicity.
    y = jnp.dot(wct_ref[...], x_ref[...],
                preferred_element_type=jnp.float32) + bc_ref[...]      # (F, B*HW)
    y = jnp.maximum(y, 0.0)                                            # bias + ReLU
    # Global average pool folded into a second MXU push; result is already
    # feature-major (F, B) -> no relayout needed downstream.
    return jnp.dot(y, pool_ref[...], preferred_element_type=jnp.float32)


# ----------------------------------------------------------------------------
# Fused kernel: stem + fc_img  (material is None path), feature-major head.
# ----------------------------------------------------------------------------
def _fused_img_kernel(x_ref, wct_ref, bc_ref, pool_ref,
                      w1t_ref, b1t_ref, w2t_ref, b2t_ref, out_ref):
    feats_t = _stem_features_t(x_ref, wct_ref, bc_ref, pool_ref)       # (F, B)
    h_t = jnp.maximum(
        jnp.dot(w1t_ref[...], feats_t,
                preferred_element_type=jnp.float32) + b1t_ref[...], 0.0)
    o_t = jnp.dot(w2t_ref[...], h_t,
                  preferred_element_type=jnp.float32) + b2t_ref[...]   # (C, B)
    # Only remaining transpose: the tiny (C, B) logits tile.
    out_ref[...] = o_t.T.astype(out_ref.dtype)


def fused_forward_img(x, wct, bc, pool, w1t, b1t, w2t, b2t):
    B = pool.shape[1]
    C = w2t.shape[0]
    args = (x, wct, bc, pool, w1t, b1t, w2t, b2t)
    return pl.pallas_call(
        _fused_img_kernel,
        out_shape=jax.ShapeDtypeStruct((B, C), jnp.float32),
        grid_spec=pltpu.PrefetchScalarGridSpec(
            num_scalar_prefetch=0,
            grid=(1,),
            in_specs=[_fullblock(a.shape) for a in args],
            out_specs=_fullblock((B, C)),
        ),
        compiler_params=_COMPILER_PARAMS,
    )(*args)


# ----------------------------------------------------------------------------
# Fused kernel: stem + embedding lookup + (folded concat) + fc_comb.
# Material indices arrive via scalar prefetch (SMEM); the lookup is B direct
# dynamic row reads from the VMEM-resident embedding table (no one-hot matmul).
# ----------------------------------------------------------------------------
def _fused_comb_kernel(mat_ref, x_ref, wct_ref, bc_ref, pool_ref, emb_ref,
                       w1it_ref, w1mt_ref, b1t_ref, w2t_ref, b2t_ref, out_ref):
    B = pool_ref.shape[1]
    nm = emb_ref.shape[0]
    feats_t = _stem_features_t(x_ref, wct_ref, bc_ref, pool_ref)       # (F, B)

    # Embedding lookup: direct dynamic sublane reads, clamped like jnp.take.
    rows = []
    for b in range(B):                                                 # B tiny
        idx = jnp.clip(mat_ref[b], 0, nm - 1)
        rows.append(emb_ref[pl.ds(idx, 1), :])                         # (1, M)
    mat_emb = jnp.concatenate(rows, axis=0)                            # (B, M)

    # fc_comb: Linear -> ReLU -> (Dropout = id) -> Linear.  The concat is
    # folded into a split first matmul over the pre-split (out, in) blocks;
    # the mat_emb contribution contracts M against M (A @ B^T form) so no
    # explicit transpose of mat_emb is materialized.
    h_t = (jnp.dot(w1it_ref[...], feats_t, preferred_element_type=jnp.float32)
           + jax.lax.dot_general(w1mt_ref[...], mat_emb,
                                 (((1,), (1,)), ((), ())),
                                 preferred_element_type=jnp.float32)
           + b1t_ref[...])
    h_t = jnp.maximum(h_t, 0.0)
    o_t = jnp.dot(w2t_ref[...], h_t,
                  preferred_element_type=jnp.float32) + b2t_ref[...]   # (C, B)
    out_ref[...] = o_t.T.astype(out_ref.dtype)


def fused_forward_comb(material, x, wct, bc, pool, emb,
                       w1it, w1mt, b1t, w2t, b2t):
    B = pool.shape[1]
    C = w2t.shape[0]
    tensor_args = (x, wct, bc, pool, emb, w1it, w1mt, b1t, w2t, b2t)
    return pl.pallas_call(
        _fused_comb_kernel,
        out_shape=jax.ShapeDtypeStruct((B, C), jnp.float32),
        grid_spec=pltpu.PrefetchScalarGridSpec(
            num_scalar_prefetch=1,
            grid=(1,),
            in_specs=[_fullblock(a.shape, with_prefetch=True) for a in tensor_args],
            out_specs=_fullblock((B, C), with_prefetch=True),
        ),
        compiler_params=_COMPILER_PARAMS,
    )(material, *tensor_args)


# ----------------------------------------------------------------------------
# Module wrapper: deterministic parameter init + forward matching the PyTorch
# FlakeLayerClassifier.forward(pixel_values, material=None) semantics.
# All Linear weights are stored in PyTorch's native (out, in) orientation and
# consumed feature-major (W @ x^T), so a checkpoint could be loaded verbatim.
# ----------------------------------------------------------------------------
class FlakeLayerClassifierPallas:
    def __init__(self, num_materials, material_dim, num_classes=4,
                 img_feat_dim=32, in_channels=3, seed=0):
        self.img_feat_dim = img_feat_dim
        self.material_dim = material_dim
        self.num_classes = num_classes
        comb = img_feat_dim + material_dim

        keys = jax.random.split(jax.random.PRNGKey(seed), 8)
        s = 0.05
        # CNN stem (stand-in for the ResNet-18 backbone), (out, in) layout.
        self.wc_t = s * jax.random.normal(keys[0], (img_feat_dim, in_channels), jnp.float32)
        self.bc = s * jax.random.normal(keys[1], (img_feat_dim, 1), jnp.float32)
        # material embedding table (rows = materials, lane axis = embedding dim)
        self.emb = s * jax.random.normal(keys[2], (num_materials, material_dim), jnp.float32)
        # fc_img: Linear(F,F) -> ReLU -> Dropout -> Linear(F,C), (out, in) weights
        self.img_w1_t = s * jax.random.normal(keys[3], (img_feat_dim, img_feat_dim), jnp.float32)
        self.img_b1_t = jnp.zeros((img_feat_dim, 1), jnp.float32)
        self.img_w2_t = s * jax.random.normal(keys[4], (num_classes, img_feat_dim), jnp.float32)
        self.img_b2_t = jnp.zeros((num_classes, 1), jnp.float32)
        # fc_comb: Linear(F+M,F+M) -> ReLU -> Dropout -> Linear(F+M,C)
        comb_w1_t = s * jax.random.normal(keys[5], (comb, comb), jnp.float32)   # (out, in)
        # pre-split by INPUT columns: [:, :F] multiplies img feats, [:, F:] the
        # material embedding, so the kernel never builds the concatenated tensor.
        self.comb_w1_img_t = comb_w1_t[:, :img_feat_dim]   # (comb, F)
        self.comb_w1_mat_t = comb_w1_t[:, img_feat_dim:]   # (comb, M)
        self.comb_b1_t = jnp.zeros((comb, 1), jnp.float32)
        self.comb_w2_t = s * jax.random.normal(keys[6], (num_classes, comb), jnp.float32)
        self.comb_b2_t = jnp.zeros((num_classes, 1), jnp.float32)

    def forward(self, pixel_values, material=None):
        # pixel_values: (B, Cin, H, W) float32 (NCHW).  A tiny host-side
        # transpose+reshape presents the whole batch channel-major so the stem
        # is a single MXU push over (Cin, B*HW).
        B, Cin, H, W = pixel_values.shape
        HW = H * W
        x = jnp.transpose(pixel_values, (1, 0, 2, 3)).reshape(Cin, B * HW)
        # Block-diagonal mean-pool matrix: pool[b*HW+hw, b] = 1/HW.
        pool = jnp.repeat(jnp.eye(B, dtype=jnp.float32), HW, axis=0) / float(HW)
        if material is None:
            return fused_forward_img(x, self.wc_t, self.bc, pool,
                                     self.img_w1_t, self.img_b1_t,
                                     self.img_w2_t, self.img_b2_t)
        return fused_forward_comb(material.astype(jnp.int32), x,
                                  self.wc_t, self.bc, pool, self.emb,
                                  self.comb_w1_img_t, self.comb_w1_mat_t,
                                  self.comb_b1_t, self.comb_w2_t, self.comb_b2_t)

    # Pure-JAX reference of the same math (for correctness checking only).
    def reference_forward(self, pixel_values, material=None):
        B, Cin, H, W = pixel_values.shape
        x = pixel_values.reshape(B, Cin, H * W)
        feat = jnp.einsum('fc,bcp->bfp', self.wc_t, x) + self.bc[None]
        feat = jnp.maximum(feat, 0.0)
        img_feats = feat.mean(axis=-1)                                  # (B, F)
        if material is None:
            h = jnp.maximum(img_feats @ self.img_w1_t.T + self.img_b1_t.T, 0.0)
            return h @ self.img_w2_t.T + self.img_b2_t.T
        mat_idx = jnp.clip(material, 0, self.emb.shape[0] - 1)
        mat_emb = jnp.take(self.emb, mat_idx, axis=0)
        h = jnp.maximum(img_feats @ self.comb_w1_img_t.T
                        + mat_emb @ self.comb_w1_mat_t.T
                        + self.comb_b1_t.T, 0.0)
        return h @ self.comb_w2_t.T + self.comb_b2_t.T


if __name__ == "__main__":
    B, Cin, H, W = 2, 3, 16, 16
    num_materials, material_dim, num_classes, img_feat_dim = 5, 8, 4, 32

    key = jax.random.PRNGKey(0)
    k_px, k_mat = jax.random.split(key)
    pixel_values = jax.random.normal(k_px, (B, Cin, H, W), jnp.float32)
    material = jax.random.randint(k_mat, (B,), 0, num_materials, dtype=jnp.int32)

    model = FlakeLayerClassifierPallas(num_materials, material_dim,
                                       num_classes=num_classes,
                                       img_feat_dim=img_feat_dim,
                                       in_channels=Cin, seed=0)

    logits_img = model.forward(pixel_values)                 # material is None path
    logits_comb = model.forward(pixel_values, material)      # combined path
    jax.block_until_ready((logits_img, logits_comb))

    assert logits_img.shape == (B, num_classes)
    assert logits_comb.shape == (B, num_classes)

    ref_img = model.reference_forward(pixel_values)
    ref_comb = model.reference_forward(pixel_values, material)
    assert jnp.allclose(logits_img, ref_img, atol=1e-3, rtol=1e-3)
    assert jnp.allclose(logits_comb, ref_comb, atol=1e-3, rtol=1e-3)

    print("KERNEL_OK")
</pallas_src>

<mosaic_0001>
module attributes {stable_mosaic.version = 11 : i64} {
  func.func @_fused_img_kernel(%arg0: i32, %arg1: memref<3x512xf32, #tpu.memory_space<vmem>>, %arg2: memref<32x3xf32, #tpu.memory_space<vmem>>, %arg3: memref<32x1xf32, #tpu.memory_space<vmem>>, %arg4: memref<512x2xf32, #tpu.memory_space<vmem>>, %arg5: memref<32x32xf32, #tpu.memory_space<vmem>>, %arg6: memref<32x1xf32, #tpu.memory_space<vmem>>, %arg7: memref<4x32xf32, #tpu.memory_space<vmem>>, %arg8: memref<4x1xf32, #tpu.memory_space<vmem>>, %arg9: memref<2x4xf32, #tpu.memory_space<vmem>>) attributes {dimension_semantics = [#tpu.dimension_semantics<arbitrary>], iteration_bounds = array<i64: 1>, scalar_prefetch = 0 : i64, scratch_operands = 0 : i64, tpu.core_type = #tpu.core_type<tc>, window_params = [{pipeline_mode = #tpu.pipeline_mode<synchronous>, transform_indices = @transform_0, window_bounds = array<i64: 3, 512>}, {pipeline_mode = #tpu.pipeline_mode<synchronous>, transform_indices = @transform_1, window_bounds = array<i64: 32, 3>}, {pipeline_mode = #tpu.pipeline_mode<synchronous>, transform_indices = @transform_2, window_bounds = array<i64: 32, 1>}, {pipeline_mode = #tpu.pipeline_mode<synchronous>, transform_indices = @transform_3, window_bounds = array<i64: 512, 2>}, {pipeline_mode = #tpu.pipeline_mode<synchronous>, transform_indices = @transform_4, window_bounds = array<i64: 32, 32>}, {pipeline_mode = #tpu.pipeline_mode<synchronous>, transform_indices = @transform_5, window_bounds = array<i64: 32, 1>}, {pipeline_mode = #tpu.pipeline_mode<synchronous>, transform_indices = @transform_6, window_bounds = array<i64: 4, 32>}, {pipeline_mode = #tpu.pipeline_mode<synchronous>, transform_indices = @transform_7, window_bounds = array<i64: 4, 1>}, {pipeline_mode = #tpu.pipeline_mode<synchronous>, transform_indices = @transform_8, window_bounds = array<i64: 2, 4>}]} {
    %c0 = arith.constant 0 : index
    %c0_0 = arith.constant 0 : index
    %0 = vector.load %arg2[%c0, %c0_0] : memref<32x3xf32, #tpu.memory_space<vmem>>, vector<32x3xf32>
    %c0_1 = arith.constant 0 : index
    %c0_2 = arith.constant 0 : index
    %1 = vector.load %arg1[%c0_1, %c0_2] : memref<3x512xf32, #tpu.memory_space<vmem>>, vector<3x512xf32>
    %cst = arith.constant dense<0.000000e+00> : vector<32x512xf32>
    %2 = tpu.matmul %0, %1, %cst {dimension_numbers = #tpu.dot_dimension_numbers<[1], [0], [0], [1], [0, 0, 1, 1], [], []>} : vector<32x3xf32>, vector<3x512xf32>, vector<32x512xf32> -> vector<32x512xf32>
    %c0_3 = arith.constant 0 : index
    %c0_4 = arith.constant 0 : index
    %3 = vector.load %arg3[%c0_3, %c0_4] : memref<32x1xf32, #tpu.memory_space<vmem>>, vector<32x1xf32>
    %4 = vector.broadcast %3 : vector<32x1xf32> to vector<32x512xf32>
    %5 = arith.addf %2, %4 : vector<32x512xf32>
    %cst_5 = arith.constant 0.000000e+00 : f32
    %6 = vector.broadcast %cst_5 : f32 to vector<32x512xf32>
    %7 = arith.maximumf %5, %6 : vector<32x512xf32>
    %c0_6 = arith.constant 0 : index
    %c0_7 = arith.constant 0 : index
    %8 = vector.load %arg4[%c0_6, %c0_7] : memref<512x2xf32, #tpu.memory_space<vmem>>, vector<512x2xf32>
    %cst_8 = arith.constant dense<0.000000e+00> : vector<32x2xf32>
    %9 = tpu.matmul %7, %8, %cst_8 {dimension_numbers = #tpu.dot_dimension_numbers<[1], [0], [0], [1], [0, 0, 1, 1], [], []>} : vector<32x512xf32>, vector<512x2xf32>, vector<32x2xf32> -> vector<32x2xf32>
    %c0_9 = arith.constant 0 : index
    %c0_10 = arith.constant 0 : index
    %10 = vector.load %arg5[%c0_9, %c0_10] : memref<32x32xf32, #tpu.memory_space<vmem>>, vector<32x32xf32>
    %cst_11 = arith.constant dense<0.000000e+00> : vector<32x2xf32>
    %11 = tpu.matmul %10, %9, %cst_11 {dimension_numbers = #tpu.dot_dimension_numbers<[1], [0], [0], [1], [0, 0, 1, 1], [], []>} : vector<32x32xf32>, vector<32x2xf32>, vector<32x2xf32> -> vector<32x2xf32>
    %c0_12 = arith.constant 0 : index
    %c0_13 = arith.constant 0 : index
    %12 = vector.load %arg6[%c0_12, %c0_13] : memref<32x1xf32, #tpu.memory_space<vmem>>, vector<32x1xf32>
    %13 = vector.broadcast %12 : vector<32x1xf32> to vector<32x2xf32>
    %14 = arith.addf %11, %13 : vector<32x2xf32>
    %cst_14 = arith.constant 0.000000e+00 : f32
    %15 = vector.broadcast %cst_14 : f32 to vector<32x2xf32>
    %16 = arith.maximumf %14, %15 : vector<32x2xf32>
    %c0_15 = arith.constant 0 : index
    %c0_16 = arith.constant 0 : index
    %17 = vector.load %arg7[%c0_15, %c0_16] : memref<4x32xf32, #tpu.memory_space<vmem>>, vector<4x32xf32>
    %cst_17 = arith.constant dense<0.000000e+00> : vector<4x2xf32>
    %18 = tpu.matmul %17, %16, %cst_17 {dimension_numbers = #tpu.dot_dimension_numbers<[1], [0], [0], [1], [0, 0, 1, 1], [], []>} : vector<4x32xf32>, vector<32x2xf32>, vector<4x2xf32> -> vector<4x2xf32>
    %c0_18 = arith.constant 0 : index
    %c0_19 = arith.constant 0 : index
    %19 = vector.load %arg8[%c0_18, %c0_19] : memref<4x1xf32, #tpu.memory_space<vmem>>, vector<4x1xf32>
    %20 = vector.broadcast %19 : vector<4x1xf32> to vector<4x2xf32>
    %21 = arith.addf %18, %20 : vector<4x2xf32>
    %22 = tpu.transpose %21, [1, 0] : vector<4x2xf32> -> vector<2x4xf32>
    %c0_20 = arith.constant 0 : index
    %c0_21 = arith.constant 0 : index
    %23 = vector.load %arg9[%c0_20, %c0_21] : memref<2x4xf32, #tpu.memory_space<vmem>>, vector<2x4xf32>
    tpu.vector_store %arg9[%c0_20, %c0_21], %22 {strides = array<i32>} : memref<2x4xf32, #tpu.memory_space<vmem>>, vector<2x4xf32>,
    return
  }
  func.func @transform_0(%arg0: i32) -> (i32, i32) {
    %c0_i32 = arith.constant 0 : i32
    %c0_i32_0 = arith.constant 0 : i32
    %c0_i32_1 = arith.constant 0 : i32
    return %c0_i32, %c0_i32_0 : i32, i32
  }
  func.func @transform_1(%arg0: i32) -> (i32, i32) {
    %c0_i32 = arith.constant 0 : i32
    %c0_i32_0 = arith.constant 0 : i32
    %c0_i32_1 = arith.constant 0 : i32
    return %c0_i32, %c0_i32_0 : i32, i32
  }
  func.func @transform_2(%arg0: i32) -> (i32, i32) {
    %c0_i32 = arith.constant 0 : i32
    %c0_i32_0 = arith.constant 0 : i32
    %c0_i32_1 = arith.constant 0 : i32
    return %c0_i32, %c0_i32_0 : i32, i32
  }
  func.func @transform_3(%arg0: i32) -> (i32, i32) {
    %c0_i32 = arith.constant 0 : i32
    %c0_i32_0 = arith.constant 0 : i32
    %c0_i32_1 = arith.constant 0 : i32
    return %c0_i32, %c0_i32_0 : i32, i32
  }
  func.func @transform_4(%arg0: i32) -> (i32, i32) {
    %c0_i32 = arith.constant 0 : i32
    %c0_i32_0 = arith.constant 0 : i32
    %c0_i32_1 = arith.constant 0 : i32
    return %c0_i32, %c0_i32_0 : i32, i32
  }
  func.func @transform_5(%arg0: i32) -> (i32, i32) {
    %c0_i32 = arith.constant 0 : i32
    %c0_i32_0 = arith.constant 0 : i32
    %c0_i32_1 = arith.constant 0 : i32
    return %c0_i32, %c0_i32_0 : i32, i32
  }
  func.func @transform_6(%arg0: i32) -> (i32, i32) {
    %c0_i32 = arith.constant 0 : i32
    %c0_i32_0 = arith.constant 0 : i32
    %c0_i32_1 = arith.constant 0 : i32
    return %c0_i32, %c0_i32_0 : i32, i32
  }
  func.func @transform_7(%arg0: i32) -> (i32, i32) {
    %c0_i32 = arith.constant 0 : i32
    %c0_i32_0 = arith.constant 0 : i32
    %c0_i32_1 = arith.constant 0 : i32
    return %c0_i32, %c0_i32_0 : i32, i32
  }
  func.func @transform_8(%arg0: i32) -> (i32, i32) {
    %c0_i32 = arith.constant 0 : i32
    %c0_i32_0 = arith.constant 0 : i32
    %c0_i32_1 = arith.constant 0 : i32
    return %c0_i32, %c0_i32_0 : i32, i32
  }
}

</mosaic_0001>

<llo_original>
// kernel: tpu_custom_call.1
$region0: #{tpu_custom_call.1}
  #allocation0 [shape = 'u32[]', space=smem, size = 0x4, offset = 0x4, fixed_abs, tag = 'smem constant byte address 0x4 - core index']
  #allocation1 [shape = 'u32[144,128]{1,0:T(1,128)}', space=vmem, size = 0x12000, scoped, tag = 'internal scratch']
  %s0 = inlined_call_operand.vmem [shape: f32[3,512], index: 0, kind: input, shape index: {}]
  %s1 = inlined_call_operand.vmem [shape: f32[32,3], index: 1, kind: input, shape index: {}]
  %s2 = inlined_call_operand.vmem [shape: f32[32,1], index: 2, kind: input, shape index: {}]
  %s3 = inlined_call_operand.vmem [shape: f32[512,2], index: 3, kind: input, shape index: {}]
  %s4 = inlined_call_operand.vmem [shape: f32[32,32], index: 4, kind: input, shape index: {}]
  %s5 = inlined_call_operand.vmem [shape: f32[32,1], index: 5, kind: input, shape index: {}]
  %s6 = inlined_call_operand.vmem [shape: f32[4,32], index: 6, kind: input, shape index: {}]
  %s7 = inlined_call_operand.vmem [shape: f32[4,1], index: 7, kind: input, shape index: {}]
  %s8 = inlined_call_operand.hbm [shape: f32[2,4], index: 8, kind: output, shape index: {}]
  %s9 = sld [smem:[#allocation0]]
  $region42: #{tpu_custom_call.1} parent=0
    _
  %s11 = ssub.s32 1, %s9
  %s12 = scalar_select 0, %s11, %s9
  $region1: #{tpu_custom_call.1} parent=0
    #allocation2 [shape = 'u8[1024]{0}', space=vmem, size = 0x400, scoped, tag = 'output window, operand 0, single buffered']
    #allocation3 [shape = 's32[1]{0}', space=sflag, size = 0x4, scoped, tag = 'scoped memory for tpu_custom_call.1']
    %13 = vsyncpa [#allocation3], 0
    // Predicated region
    $region2: #{tpu_custom_call.1} parent=1 // pred_check
      _
    $region3: #{tpu_custom_call.1} parent=1 // pred_check_branch
      %15 = sbr.rel (0) target = $region5
    $region4: #{tpu_custom_call.1} parent=1 // pred_region
      _
    $region5: #{tpu_custom_call.1} parent=1 // pred_fallthru
      _
    // Predicated region
    $region6: #{tpu_custom_call.1} parent=1 // pred_check
      _
    $region7: #{tpu_custom_call.1} parent=1 // pred_check_branch
      %17 = sbr.rel (0) target = $region9
    $region8: #{tpu_custom_call.1} parent=1 // pred_region
      _
    $region9: #{tpu_custom_call.1} parent=1 // pred_fallthru
      _
    // Predicated region
    $region10: #{tpu_custom_call.1} parent=1 // pred_check
      _
    $region11: #{tpu_custom_call.1} parent=1 // pred_check_branch
      %19 = sbr.rel (0) target = $region13
    $region12: #{tpu_custom_call.1} parent=1 // pred_region
      _
    $region13: #{tpu_custom_call.1} parent=1 // pred_fallthru
      _
    // Predicated region
    $region14: #{tpu_custom_call.1} parent=1 // pred_check
      _
    $region15: #{tpu_custom_call.1} parent=1 // pred_check_branch
      %21 = sbr.rel (0) target = $region17
    $region16: #{tpu_custom_call.1} parent=1 // pred_region
      _
    $region17: #{tpu_custom_call.1} parent=1 // pred_fallthru
      _
    // Predicated region
    $region18: #{tpu_custom_call.1} parent=1 // pred_check
      _
    $region19: #{tpu_custom_call.1} parent=1 // pred_check_branch
      %23 = sbr.rel (0) target = $region21
    $region20: #{tpu_custom_call.1} parent=1 // pred_region
      _
    $region21: #{tpu_custom_call.1} parent=1 // pred_fallthru
      _
    // Predicated region
    $region22: #{tpu_custom_call.1} parent=1 // pred_check
      _
    $region23: #{tpu_custom_call.1} parent=1 // pred_check_branch
      %25 = sbr.rel (0) target = $region25
    $region24: #{tpu_custom_call.1} parent=1 // pred_region
      _
    $region25: #{tpu_custom_call.1} parent=1 // pred_fallthru
      _
    // Predicated region
    $region26: #{tpu_custom_call.1} parent=1 // pred_check
      _
    $region27: #{tpu_custom_call.1} parent=1 // pred_check_branch
      %27 = sbr.rel (0) target = $region29
    $region28: #{tpu_custom_call.1} parent=1 // pred_region
      _
    $region29: #{tpu_custom_call.1} parent=1 // pred_fallthru
      _
    // Predicated region
    $region30: #{tpu_custom_call.1} parent=1 // pred_check
      _
    $region31: #{tpu_custom_call.1} parent=1 // pred_check_branch
      %29 = sbr.rel (0) target = $region33
    $region32: #{tpu_custom_call.1} parent=1 // pred_region
      _
    $region33: #{tpu_custom_call.1} parent=1 // pred_fallthru
      _
    %v30 = vld [vmem:[%s1] sm:$0xff]
    %v31 = vld [vmem:[%s1 + $0x8] sm:$0xff]
    %v32 = vld [vmem:[%s1 + $0x10] sm:$0xff]
    %v33 = vld [vmem:[%s1 + $0x18] sm:$0xff]
    %v34 = vld [vmem:[%s0] sm:$0x77]
    %v35 = vld [vmem:[%s0 + $0x8] sm:$0x77]
    %v36 = vld [vmem:[%s2] sm:$0xff]
    %v37 = vld [vmem:[%s2 + $0x8] sm:$0xff]
    %v38 = vld [vmem:[%s2 + $0x10] sm:$0xff]
    %v39 = vld [vmem:[%s2 + $0x18] sm:$0xff]
    %41 = vset.pattern.permute.xlu0 0
    %42 = vperm.xlu0 %41, %v36
    %v43 = vpop.permute.xlu0 %42
    %46 = vset.pattern.permute.xlu0 0
    %47 = vperm.xlu0 %46, %v37
    %v48 = vpop.permute.xlu0 %47
    %51 = vset.pattern.permute.xlu0 0
    %52 = vperm.xlu0 %51, %v38
    %v53 = vpop.permute.xlu0 %52
    %56 = vset.pattern.permute.xlu0 0
    %57 = vperm.xlu0 %56, %v39
    %v58 = vpop.permute.xlu0 %57
    %v62 = vcombine.high %v34, %v34
    %v63 = vcombine.high %v35, %v35
    %vm64 = vcmask 23552
    %v66 = vsel %vm64, %v30, 0
    %v69 = vsel %vm64, %v31, 0
    %v72 = vsel %vm64, %v32, 0
    %v75 = vsel %vm64, %v33, 0
    %vm77 = vcmask 1042432
    %v78 = vsel %vm77, %v34, 0
    %v80 = vsel %vm77, %v62, 0
    %v82 = vsel %vm77, %v35, 0
    %v84 = vsel %vm77, %v63, 0
    %86 = vmatprep.subr.mxu0 0.0
    %87 = vmatpush1.msra.mxu0 0.0
    %88 = vmatprep.subr.mxu0 0.0
    %89 = vmatpush1.msra.mxu0 0.0
    %90 = vmatprep.subr.mxu0 0.0
    %91 = vmatpush1.msra.mxu0 0.0
    %92 = vmatprep.subr.mxu0 0.0
    %93 = vmatpush1.msra.mxu0 0.0
    %94 = vmatprep.subr.mxu0 0.0
    %95 = vmatpush1.msra.mxu0 0.0
    %96 = vmatprep.subr.mxu0 0.0
    %97 = vmatpush1.msra.mxu0 0.0
    %98 = vmatprep.subr.mxu0 0.0
    %99 = vmatpush1.msra.mxu0 0.0
    %100 = vmatprep.subr.mxu0 0.0
    %101 = vmatpush1.msra.mxu0 0.0
    %102 = vmatprep.subr.mxu0 0.0
    %103 = vmatpush1.msra.mxu0 0.0
    %104 = vmatprep.subr.mxu0 0.0
    %105 = vmatpush1.msra.mxu0 0.0
    %106 = vmatprep.subr.mxu0 0.0
    %107 = vmatpush1.msra.mxu0 0.0
    %108 = vmatprep.subr.mxu0 0.0
    %109 = vmatpush1.msra.mxu0 0.0
    %110 = vmatprep.subr.mxu0 0.0
    %111 = vmatpush1.msra.mxu0 0.0
    %112 = vmatprep.subr.mxu0 0.0
    %113 = vmatpush1.msra.mxu0 0.0
    %114 = vmatprep.subr.mxu0 0.0
    %115 = vmatpush1.msra.mxu0 0.0
    %116 = vmatprep.subr.mxu0 %v80
    %117 = vmatpush1.msra.mxu0 %v78
    %118 = vmatprep.subr.mxu0 0.0
    %119 = vmatpush2.msra.mxu0 0.0
    %120 = vmatprep.subr.mxu0 0.0
    %121 = vmatpush2.msra.mxu0 0.0
    %122 = vmatprep.subr.mxu0 0.0
    %123 = vmatpush2.msra.mxu0 0.0
    %124 = vmatprep.subr.mxu0 0.0
    %125 = vmatpush2.msra.mxu0 0.0
    %126 = vmatprep.subr.mxu0 0.0
    %127 = vmatpush2.msra.mxu0 0.0
    %128 = vmatprep.subr.mxu0 0.0
    %129 = vmatpush2.msra.mxu0 0.0
    %130 = vmatprep.subr.mxu0 0.0
    %131 = vmatpush2.msra.mxu0 0.0
    %132 = vmatprep.subr.mxu0 0.0
    %133 = vmatpush2.msra.mxu0 0.0
    %134 = vmatprep.subr.mxu0 0.0
    %135 = vmatpush2.msra.mxu0 0.0
    %136 = vmatprep.subr.mxu0 0.0
    %137 = vmatpush2.msra.mxu0 0.0
    %138 = vmatprep.subr.mxu0 0.0
    %139 = vmatpush2.msra.mxu0 0.0
    %140 = vmatprep.subr.mxu0 0.0
    %141 = vmatpush2.msra.mxu0 0.0
    %142 = vmatprep.subr.mxu0 0.0
    %143 = vmatpush2.msra.mxu0 0.0
    %144 = vmatprep.subr.mxu0 0.0
    %145 = vmatpush2.msra.mxu0 0.0
    %146 = vmatprep.subr.mxu0 0.0
    %147 = vmatpush2.msra.mxu0 0.0
    %148 = vmatprep.subr.mxu0 0.0
    %149 = vmatpush2.msra.mxu0 0.0
    %150 = vmatprep.mubr.f32.mxu0 0.0
    %151 = vmatmul.mubr.f32.gmra.mxu0 %v66
    %v152 = vpop.f32.mrf.mxu0
    %v153 = vadd.f32 %v43, %v152
    %v154 = vpop.f32.mrf.mxu0
    %v155 = vadd.f32 %v43, %v154
    %156 = vmatprep.mubr.f32.mxu0 0.0
    %157 = vmatmul.mubr.f32.gmra.mxu0 %v69
    %v158 = vpop.f32.mrf.mxu0
    %v159 = vadd.f32 %v48, %v158
    %v160 = vpop.f32.mrf.mxu0
    %v161 = vadd.f32 %v48, %v160
    %162 = vmatprep.mubr.f32.mxu0 0.0
    %163 = vmatmul.mubr.f32.gmra.mxu0 %v72
    %v164 = vpop.f32.mrf.mxu0
    %v165 = vadd.f32 %v53, %v164
    %v166 = vpop.f32.mrf.mxu0
    %v167 = vadd.f32 %v53, %v166
    %168 = vmatprep.mubr.f32.mxu0 0.0
    %169 = vmatmul.mubr.f32.gmra.mxu0 %v75
    %v170 = vpop.f32.mrf.mxu0
    %v171 = vadd.f32 %v58, %v170
    %v172 = vpop.f32.mrf.mxu0
    %v173 = vadd.f32 %v58, %v172
    %174 = vdwg.mxu0
    %175 = vmatprep.subr.mxu0 0.0
    %176 = vmatpush1.msra.mxu0 0.0
    %177 = vmatprep.subr.mxu0 0.0
    %178 = vmatpush1.msra.mxu0 0.0
    %179 = vmatprep.subr.mxu0 0.0
    %180 = vmatpush1.msra.mxu0 0.0
    %181 = vmatprep.subr.mxu0 0.0
    %182 = vmatpush1.msra.mxu0 0.0
    %183 = vmatprep.subr.mxu0 0.0
    %184 = vmatpush1.msra.mxu0 0.0
    %185 = vmatprep.subr.mxu0 0.0
    %186 = vmatpush1.msra.mxu0 0.0
    %187 = vmatprep.subr.mxu0 0.0
    %188 = vmatpush1.msra.mxu0 0.0
    %189 = vmatprep.subr.mxu0 0.0
    %190 = vmatpush1.msra.mxu0 0.0
    %191 = vmatprep.subr.mxu0 0.0
    %192 = vmatpush1.msra.mxu0 0.0
    %193 = vmatprep.subr.mxu0 0.0
    %194 = vmatpush1.msra.mxu0 0.0
    %195 = vmatprep.subr.mxu0 0.0
    %196 = vmatpush1.msra.mxu0 0.0
    %197 = vmatprep.subr.mxu0 0.0
    %198 = vmatpush1.msra.mxu0 0.0
    %199 = vmatprep.subr.mxu0 0.0
    %200 = vmatpush1.msra.mxu0 0.0
    %201 = vmatprep.subr.mxu0 0.0
    %202 = vmatpush1.msra.mxu0 0.0
    %203 = vmatprep.subr.mxu0 0.0
    %204 = vmatpush1.msra.mxu0 0.0
    %205 = vmatprep.subr.mxu0 %v84
    %206 = vmatpush1.msra.mxu0 %v82
    %207 = vmatprep.subr.mxu0 0.0
    %208 = vmatpush2.msra.mxu0 0.0
    %209 = vmatprep.subr.mxu0 0.0
    %210 = vmatpush2.msra.mxu0 0.0
    %211 = vmatprep.subr.mxu0 0.0
    %212 = vmatpush2.msra.mxu0 0.0
    %213 = vmatprep.subr.mxu0 0.0
    %214 = vmatpush2.msra.mxu0 0.0
    %215 = vmatprep.subr.mxu0 0.0
    %216 = vmatpush2.msra.mxu0 0.0
    %217 = vmatprep.subr.mxu0 0.0
    %218 = vmatpush2.msra.mxu0 0.0
    %219 = vmatprep.subr.mxu0 0.0
    %220 = vmatpush2.msra.mxu0 0.0
    %221 = vmatprep.subr.mxu0 0.0
    %222 = vmatpush2.msra.mxu0 0.0
    %223 = vmatprep.subr.mxu0 0.0
    %224 = vmatpush2.msra.mxu0 0.0
    %225 = vmatprep.subr.mxu0 0.0
    %226 = vmatpush2.msra.mxu0 0.0
    %227 = vmatprep.subr.mxu0 0.0
    %228 = vmatpush2.msra.mxu0 0.0
    %229 = vmatprep.subr.mxu0 0.0
    %230 = vmatpush2.msra.mxu0 0.0
    %231 = vmatprep.subr.mxu0 0.0
    %232 = vmatpush2.msra.mxu0 0.0
    %233 = vmatprep.subr.mxu0 0.0
    %234 = vmatpush2.msra.mxu0 0.0
    %235 = vmatprep.subr.mxu0 0.0
    %236 = vmatpush2.msra.mxu0 0.0
    %237 = vmatprep.subr.mxu0 0.0
    %238 = vmatpush2.msra.mxu0 0.0
    %239 = vmatprep.mubr.f32.mxu0 0.0
    %240 = vmatmul.mubr.f32.gmra.mxu0 %v66
    %v241 = vpop.f32.mrf.mxu0
    %v242 = vadd.f32 %v43, %v241
    %v243 = vpop.f32.mrf.mxu0
    %v244 = vadd.f32 %v43, %v243
    %245 = vmatprep.mubr.f32.mxu0 0.0
    %246 = vmatmul.mubr.f32.gmra.mxu0 %v69
    %v247 = vpop.f32.mrf.mxu0
    %v248 = vadd.f32 %v48, %v247
    %v249 = vpop.f32.mrf.mxu0
    %v250 = vadd.f32 %v48, %v249
    %251 = vmatprep.mubr.f32.mxu0 0.0
    %252 = vmatmul.mubr.f32.gmra.mxu0 %v72
    %v253 = vpop.f32.mrf.mxu0
    %v254 = vadd.f32 %v53, %v253
    %v255 = vpop.f32.mrf.mxu0
    %v256 = vadd.f32 %v53, %v255
    %257 = vmatprep.mubr.f32.mxu0 0.0
    %258 = vmatmul.mubr.f32.gmra.mxu0 %v75
    %v259 = vpop.f32.mrf.mxu0
    %v260 = vadd.f32 %v58, %v259
    %v261 = vpop.f32.mrf.mxu0
    %v262 = vadd.f32 %v58, %v261
    %263 = vdwg.mxu0
    %v264 = vmax.f32 %v153, 0.0
    %v265 = vmax.f32 %v155, 0.0
    %v266 = vmax.f32 %v242, 0.0
    %v267 = vmax.f32 %v244, 0.0
    %v268 = vmax.f32 %v159, 0.0
    %v269 = vmax.f32 %v161, 0.0
    %v270 = vmax.f32 %v248, 0.0
    %v271 = vmax.f32 %v250, 0.0
    %v272 = vmax.f32 %v165, 0.0
    %v273 = vmax.f32 %v167, 0.0
    %v274 = vmax.f32 %v254, 0.0
    %v275 = vmax.f32 %v256, 0.0
    %v276 = vmax.f32 %v171, 0.0
    %v277 = vmax.f32 %v173, 0.0
    %v278 = vmax.f32 %v260, 0.0
    %v279 = vmax.f32 %v262, 0.0
    %v280 = vld [vmem:[%s3] sm:$0xff]
    %v281 = vld [vmem:[%s3 + $0x8] sm:$0xff]
    %v282 = vld [vmem:[%s3 + $0x10] sm:$0xff]
    %v283 = vld [vmem:[%s3 + $0x18] sm:$0xff]
    %v284 = vld [vmem:[%s3 + $0x20] sm:$0xff]
    %v285 = vld [vmem:[%s3 + $0x28] sm:$0xff]
    %v286 = vld [vmem:[%s3 + $0x30] sm:$0xff]
    %v287 = vld [vmem:[%s3 + $0x38] sm:$0xff]
    %v288 = vld [vmem:[%s3 + $0x40] sm:$0xff]
    %v289 = vld [vmem:[%s3 + $0x48] sm:$0xff]
    %v290 = vld [vmem:[%s3 + $0x50] sm:$0xff]
    %v291 = vld [vmem:[%s3 + $0x58] sm:$0xff]
    %v292 = vld [vmem:[%s3 + $0x60] sm:$0xff]
    %v293 = vld [vmem:[%s3 + $0x68] sm:$0xff]
    %v294 = vld [vmem:[%s3 + $0x70] sm:$0xff]
    %v295 = vld [vmem:[%s3 + $0x78] sm:$0xff]
    %v296 = vld [vmem:[%s3 + $0x80] sm:$0xff]
    %v297 = vld [vmem:[%s3 + $0x88] sm:$0xff]
    %v298 = vld [vmem:[%s3 + $0x90] sm:$0xff]
    %v299 = vld [vmem:[%s3 + $0x98] sm:$0xff]
    %v300 = vld [vmem:[%s3 + $0xa0] sm:$0xff]
    %v301 = vld [vmem:[%s3 + $0xa8] sm:$0xff]
    %v302 = vld [vmem:[%s3 + $0xb0] sm:$0xff]
    %v303 = vld [vmem:[%s3 + $0xb8] sm:$0xff]
    %v304 = vld [vmem:[%s3 + $0xc0] sm:$0xff]
    %v305 = vld [vmem:[%s3 + $0xc8] sm:$0xff]
    %v306 = vld [vmem:[%s3 + $0xd0] sm:$0xff]
    %v307 = vld [vmem:[%s3 + $0xd8] sm:$0xff]
    %v308 = vld [vmem:[%s3 + $0xe0] sm:$0xff]
    %v309 = vld [vmem:[%s3 + $0xe8] sm:$0xff]
    %v310 = vld [vmem:[%s3 + $0xf0] sm:$0xff]
    %v311 = vld [vmem:[%s3 + $0xf8] sm:$0xff]
    %v312 = vld [vmem:[%s3 + $0x100] sm:$0xff]
    %v313 = vld [vmem:[%s3 + $0x108] sm:$0xff]
    %v314 = vld [vmem:[%s3 + $0x110] sm:$0xff]
    %v315 = vld [vmem:[%s3 + $0x118] sm:$0xff]
    %v316 = vld [vmem:[%s3 + $0x120] sm:$0xff]
    %v317 = vld [vmem:[%s3 + $0x128] sm:$0xff]
    %v318 = vld [vmem:[%s3 + $0x130] sm:$0xff]
    %v319 = vld [vmem:[%s3 + $0x138] sm:$0xff]
    %v320 = vld [vmem:[%s3 + $0x140] sm:$0xff]
    %v321 = vld [vmem:[%s3 + $0x148] sm:$0xff]
    %v322 = vld [vmem:[%s3 + $0x150] sm:$0xff]
    %v323 = vld [vmem:[%s3 + $0x158] sm:$0xff]
    %v324 = vld [vmem:[%s3 + $0x160] sm:$0xff]
    %v325 = vld [vmem:[%s3 + $0x168] sm:$0xff]
    %v326 = vld [vmem:[%s3 + $0x170] sm:$0xff]
    %v327 = vld [vmem:[%s3 + $0x178] sm:$0xff]
    %v328 = vld [vmem:[%s3 + $0x180] sm:$0xff]
    %v329 = vld [vmem:[%s3 + $0x188] sm:$0xff]
    %v330 = vld [vmem:[%s3 + $0x190] sm:$0xff]
    %v331 = vld [vmem:[%s3 + $0x198] sm:$0xff]
    %v332 = vld [vmem:[%s3 + $0x1a0] sm:$0xff]
    %v333 = vld [vmem:[%s3 + $0x1a8] sm:$0xff]
    %v334 = vld [vmem:[%s3 + $0x1b0] sm:$0xff]
    %v335 = vld [vmem:[%s3 + $0x1b8] sm:$0xff]
    %v336 = vld [vmem:[%s3 + $0x1c0] sm:$0xff]
    %v337 = vld [vmem:[%s3 + $0x1c8] sm:$0xff]
    %v338 = vld [vmem:[%s3 + $0x1d0] sm:$0xff]
    %v339 = vld [vmem:[%s3 + $0x1d8] sm:$0xff]
    %v340 = vld [vmem:[%s3 + $0x1e0] sm:$0xff]
    %v341 = vld [vmem:[%s3 + $0x1e8] sm:$0xff]
    %v342 = vld [vmem:[%s3 + $0x1f0] sm:$0xff]
    %v343 = vld [vmem:[%s3 + $0x1f8] sm:$0xff]
    %344 = vmatprep.subr.mxu0 0.0
    %345 = vmatpush1.msra.mxu0 %v295
    %346 = vmatprep.subr.mxu0 0.0
    %347 = vmatpush1.msra.mxu0 %v294
    %348 = vmatprep.subr.mxu0 0.0
    %349 = vmatpush1.msra.mxu0 %v293
    %350 = vmatprep.subr.mxu0 0.0
    %351 = vmatpush1.msra.mxu0 %v292
    %352 = vmatprep.subr.mxu0 0.0
    %353 = vmatpush1.msra.mxu0 %v291
    %354 = vmatprep.subr.mxu0 0.0
    %355 = vmatpush1.msra.mxu0 %v290
    %356 = vmatprep.subr.mxu0 0.0
    %357 = vmatpush1.msra.mxu0 %v289
    %358 = vmatprep.subr.mxu0 0.0
    %359 = vmatpush1.msra.mxu0 %v288
    %360 = vmatprep.subr.mxu0 0.0
    %361 = vmatpush1.msra.mxu0 %v287
    %362 = vmatprep.subr.mxu0 0.0
    %363 = vmatpush1.msra.mxu0 %v286
    %364 = vmatprep.subr.mxu0 0.0
    %365 = vmatpush1.msra.mxu0 %v285
    %366 = vmatprep.subr.mxu0 0.0
    %367 = vmatpush1.msra.mxu0 %v284
    %368 = vmatprep.subr.mxu0 0.0
    %369 = vmatpush1.msra.mxu0 %v283
    %370 = vmatprep.subr.mxu0 0.0
    %371 = vmatpush1.msra.mxu0 %v282
    %372 = vmatprep.subr.mxu0 0.0
    %373 = vmatpush1.msra.mxu0 %v281
    %374 = vmatprep.subr.mxu0 0.0
    %375 = vmatpush1.msra.mxu0 %v280
    %376 = vmatprep.subr.mxu0 0.0
    %377 = vmatpush2.msra.mxu0 %v311
    %378 = vmatprep.subr.mxu0 0.0
    %379 = vmatpush2.msra.mxu0 %v310
    %380 = vmatprep.subr.mxu0 0.0
    %381 = vmatpush2.msra.mxu0 %v309
    %382 = vmatprep.subr.mxu0 0.0
    %383 = vmatpush2.msra.mxu0 %v308
    %384 = vmatprep.subr.mxu0 0.0
    %385 = vmatpush2.msra.mxu0 %v307
    %386 = vmatprep.subr.mxu0 0.0
    %387 = vmatpush2.msra.mxu0 %v306
    %388 = vmatprep.subr.mxu0 0.0
    %389 = vmatpush2.msra.mxu0 %v305
    %390 = vmatprep.subr.mxu0 0.0
    %391 = vmatpush2.msra.mxu0 %v304
    %392 = vmatprep.subr.mxu0 0.0
    %393 = vmatpush2.msra.mxu0 %v303
    %394 = vmatprep.subr.mxu0 0.0
    %395 = vmatpush2.msra.mxu0 %v302
    %396 = vmatprep.subr.mxu0 0.0
    %397 = vmatpush2.msra.mxu0 %v301
    %398 = vmatprep.subr.mxu0 0.0
    %399 = vmatpush2.msra.mxu0 %v300
    %400 = vmatprep.subr.mxu0 0.0
    %401 = vmatpush2.msra.mxu0 %v299
    %402 = vmatprep.subr.mxu0 0.0
    %403 = vmatpush2.msra.mxu0 %v298
    %404 = vmatprep.subr.mxu0 0.0
    %405 = vmatpush2.msra.mxu0 %v297
    %406 = vmatprep.subr.mxu0 0.0
    %407 = vmatpush2.msra.mxu0 %v296
    %408 = vmatprep.mubr.f32.mxu0 %v265
    %409 = vmatmul.mubr.f32.gmra.mxu0 %v264
    %v410 = vpop.f32.mrf.mxu0
    %v411 = vadd.f32 0.0, %v410
    %v412 = vpop.f32.mrf.mxu0
    %413 = vmatprep.mubr.f32.mxu0 %v269
    %414 = vmatmul.mubr.f32.gmra.mxu0 %v268
    %v415 = vpop.f32.mrf.mxu0
    %v416 = vadd.f32 0.0, %v415
    %v417 = vpop.f32.mrf.mxu0
    %418 = vmatprep.mubr.f32.mxu0 %v273
    %419 = vmatmul.mubr.f32.gmra.mxu0 %v272
    %v420 = vpop.f32.mrf.mxu0
    %v421 = vadd.f32 0.0, %v420
    %v422 = vpop.f32.mrf.mxu0
    %423 = vmatprep.mubr.f32.mxu0 %v277
    %424 = vmatmul.mubr.f32.gmra.mxu0 %v276
    %v425 = vpop.f32.mrf.mxu0
    %v426 = vadd.f32 0.0, %v425
    %v427 = vpop.f32.mrf.mxu0
    %428 = vdwg.mxu0
    %429 = vmatprep.subr.mxu0 0.0
    %430 = vmatpush1.msra.mxu0 %v327
    %431 = vmatprep.subr.mxu0 0.0
    %432 = vmatpush1.msra.mxu0 %v326
    %433 = vmatprep.subr.mxu0 0.0
    %434 = vmatpush1.msra.mxu0 %v325
    %435 = vmatprep.subr.mxu0 0.0
    %436 = vmatpush1.msra.mxu0 %v324
    %437 = vmatprep.subr.mxu0 0.0
    %438 = vmatpush1.msra.mxu0 %v323
    %439 = vmatprep.subr.mxu0 0.0
    %440 = vmatpush1.msra.mxu0 %v322
    %441 = vmatprep.subr.mxu0 0.0
    %442 = vmatpush1.msra.mxu0 %v321
    %443 = vmatprep.subr.mxu0 0.0
    %444 = vmatpush1.msra.mxu0 %v320
    %445 = vmatprep.subr.mxu0 0.0
    %446 = vmatpush1.msra.mxu0 %v319
    %447 = vmatprep.subr.mxu0 0.0
    %448 = vmatpush1.msra.mxu0 %v318
    %449 = vmatprep.subr.mxu0 0.0
    %450 = vmatpush1.msra.mxu0 %v317
    %451 = vmatprep.subr.mxu0 0.0
    %452 = vmatpush1.msra.mxu0 %v316
    %453 = vmatprep.subr.mxu0 0.0
    %454 = vmatpush1.msra.mxu0 %v315
    %455 = vmatprep.subr.mxu0 0.0
    %456 = vmatpush1.msra.mxu0 %v314
    %457 = vmatprep.subr.mxu0 0.0
    %458 = vmatpush1.msra.mxu0 %v313
    %459 = vmatprep.subr.mxu0 0.0
    %460 = vmatpush1.msra.mxu0 %v312
    %461 = vmatprep.subr.mxu0 0.0
    %462 = vmatpush2.msra.mxu0 %v343
    %463 = vmatprep.subr.mxu0 0.0
    %464 = vmatpush2.msra.mxu0 %v342
    %465 = vmatprep.subr.mxu0 0.0
    %466 = vmatpush2.msra.mxu0 %v341
    %467 = vmatprep.subr.mxu0 0.0
    %468 = vmatpush2.msra.mxu0 %v340
    %469 = vmatprep.subr.mxu0 0.0
    %470 = vmatpush2.msra.mxu0 %v339
    %471 = vmatprep.subr.mxu0 0.0
    %472 = vmatpush2.msra.mxu0 %v338
    %473 = vmatprep.subr.mxu0 0.0
    %474 = vmatpush2.msra.mxu0 %v337
    %475 = vmatprep.subr.mxu0 0.0
    %476 = vmatpush2.msra.mxu0 %v336
    %477 = vmatprep.subr.mxu0 0.0
    %478 = vmatpush2.msra.mxu0 %v335
    %479 = vmatprep.subr.mxu0 0.0
    %480 = vmatpush2.msra.mxu0 %v334
    %481 = vmatprep.subr.mxu0 0.0
    %482 = vmatpush2.msra.mxu0 %v333
    %483 = vmatprep.subr.mxu0 0.0
    %484 = vmatpush2.msra.mxu0 %v332
    %485 = vmatprep.subr.mxu0 0.0
    %486 = vmatpush2.msra.mxu0 %v331
    %487 = vmatprep.subr.mxu0 0.0
    %488 = vmatpush2.msra.mxu0 %v330
    %489 = vmatprep.subr.mxu0 0.0
    %490 = vmatpush2.msra.mxu0 %v329
    %491 = vmatprep.subr.mxu0 0.0
    %492 = vmatpush2.msra.mxu0 %v328
    %493 = vmatprep.mubr.f32.mxu0 %v267
    %494 = vmatmul.mubr.f32.gmra.mxu0 %v266
    %v495 = vpop.f32.mrf.mxu0
    %v496 = vadd.f32 %v411, %v495
    %v497 = vpop.f32.mrf.mxu0
    %498 = vmatprep.mubr.f32.mxu0 %v271
    %499 = vmatmul.mubr.f32.gmra.mxu0 %v270
    %v500 = vpop.f32.mrf.mxu0
    %v501 = vadd.f32 %v416, %v500
    %v502 = vpop.f32.mrf.mxu0
    %503 = vmatprep.mubr.f32.mxu0 %v275
    %504 = vmatmul.mubr.f32.gmra.mxu0 %v274
    %v505 = vpop.f32.mrf.mxu0
    %v506 = vadd.f32 %v421, %v505
    %v507 = vpop.f32.mrf.mxu0
    %508 = vmatprep.mubr.f32.mxu0 %v279
    %509 = vmatmul.mubr.f32.gmra.mxu0 %v278
    %v510 = vpop.f32.mrf.mxu0
    %v511 = vadd.f32 %v426, %v510
    %v512 = vpop.f32.mrf.mxu0
    %513 = vdwg.mxu0
    %v514 = vld [vmem:[%s4] sm:$0xff]
    %v515 = vld [vmem:[%s4 + $0x8] sm:$0xff]
    %v516 = vld [vmem:[%s4 + $0x10] sm:$0xff]
    %v517 = vld [vmem:[%s4 + $0x18] sm:$0xff]
    %v518 = vld [vmem:[%s5] sm:$0xff]
    %v519 = vld [vmem:[%s5 + $0x8] sm:$0xff]
    %v520 = vld [vmem:[%s5 + $0x10] sm:$0xff]
    %v521 = vld [vmem:[%s5 + $0x18] sm:$0xff]
    %523 = vset.pattern.permute.xlu0 0
    %524 = vperm.xlu0 %523, %v518
    %v525 = vpop.permute.xlu0 %524
    %528 = vset.pattern.permute.xlu0 0
    %529 = vperm.xlu0 %528, %v519
    %v530 = vpop.permute.xlu0 %529
    %533 = vset.pattern.permute.xlu0 0
    %534 = vperm.xlu0 %533, %v520
    %v535 = vpop.permute.xlu0 %534
    %538 = vset.pattern.permute.xlu0 0
    %539 = vperm.xlu0 %538, %v521
    %v540 = vpop.permute.xlu0 %539
    %vm542 = vcmask 261120
    %v544 = vsel %vm542, %v514, 0
    %v547 = vsel %vm542, %v515, 0
    %v550 = vsel %vm542, %v516, 0
    %v553 = vsel %vm542, %v517, 0
    %555 = vmatprep.subr.mxu0 0.0
    %556 = vmatpush1.msra.mxu0 0.0
    %557 = vmatprep.subr.mxu0 0.0
    %558 = vmatpush1.msra.mxu0 0.0
    %559 = vmatprep.subr.mxu0 0.0
    %560 = vmatpush1.msra.mxu0 0.0
    %561 = vmatprep.subr.mxu0 0.0
    %562 = vmatpush1.msra.mxu0 0.0
    %563 = vmatprep.subr.mxu0 0.0
    %564 = vmatpush1.msra.mxu0 0.0
    %565 = vmatprep.subr.mxu0 0.0
    %566 = vmatpush1.msra.mxu0 0.0
    %567 = vmatprep.subr.mxu0 0.0
    %568 = vmatpush1.msra.mxu0 0.0
    %569 = vmatprep.subr.mxu0 0.0
    %570 = vmatpush1.msra.mxu0 0.0
    %571 = vmatprep.subr.mxu0 0.0
    %572 = vmatpush1.msra.mxu0 0.0
    %573 = vmatprep.subr.mxu0 0.0
    %574 = vmatpush1.msra.mxu0 0.0
    %575 = vmatprep.subr.mxu0 0.0
    %576 = vmatpush1.msra.mxu0 0.0
    %577 = vmatprep.subr.mxu0 0.0
    %578 = vmatpush1.msra.mxu0 0.0
    %579 = vmatprep.subr.mxu0 0.0
    %580 = vmatpush1.msra.mxu0 %v511
    %581 = vmatprep.subr.mxu0 0.0
    %582 = vmatpush1.msra.mxu0 %v506
    %583 = vmatprep.subr.mxu0 0.0
    %584 = vmatpush1.msra.mxu0 %v501
    %585 = vmatprep.subr.mxu0 0.0
    %586 = vmatpush1.msra.mxu0 %v496
    %587 = vmatprep.subr.mxu0 0.0
    %588 = vmatpush2.msra.mxu0 0.0
    %589 = vmatprep.subr.mxu0 0.0
    %590 = vmatpush2.msra.mxu0 0.0
    %591 = vmatprep.subr.mxu0 0.0
    %592 = vmatpush2.msra.mxu0 0.0
    %593 = vmatprep.subr.mxu0 0.0
    %594 = vmatpush2.msra.mxu0 0.0
    %595 = vmatprep.subr.mxu0 0.0
    %596 = vmatpush2.msra.mxu0 0.0
    %597 = vmatprep.subr.mxu0 0.0
    %598 = vmatpush2.msra.mxu0 0.0
    %599 = vmatprep.subr.mxu0 0.0
    %600 = vmatpush2.msra.mxu0 0.0
    %601 = vmatprep.subr.mxu0 0.0
    %602 = vmatpush2.msra.mxu0 0.0
    %603 = vmatprep.subr.mxu0 0.0
    %604 = vmatpush2.msra.mxu0 0.0
    %605 = vmatprep.subr.mxu0 0.0
    %606 = vmatpush2.msra.mxu0 0.0
    %607 = vmatprep.subr.mxu0 0.0
    %608 = vmatpush2.msra.mxu0 0.0
    %609 = vmatprep.subr.mxu0 0.0
    %610 = vmatpush2.msra.mxu0 0.0
    %611 = vmatprep.subr.mxu0 0.0
    %612 = vmatpush2.msra.mxu0 0.0
    %613 = vmatprep.subr.mxu0 0.0
    %614 = vmatpush2.msra.mxu0 0.0
    %615 = vmatprep.subr.mxu0 0.0
    %616 = vmatpush2.msra.mxu0 0.0
    %617 = vmatprep.subr.mxu0 0.0
    %618 = vmatpush2.msra.mxu0 0.0
    %619 = vmatprep.mubr.f32.mxu0 0.0
    %620 = vmatmul.mubr.f32.gmra.mxu0 %v544
    %v621 = vpop.f32.mrf.mxu0
    %v622 = vadd.f32 %v525, %v621
    %v623 = vpop.f32.mrf.mxu0
    %624 = vmatprep.mubr.f32.mxu0 0.0
    %625 = vmatmul.mubr.f32.gmra.mxu0 %v547
    %v626 = vpop.f32.mrf.mxu0
    %v627 = vadd.f32 %v530, %v626
    %v628 = vpop.f32.mrf.mxu0
    %629 = vmatprep.mubr.f32.mxu0 0.0
    %630 = vmatmul.mubr.f32.gmra.mxu0 %v550
    %v631 = vpop.f32.mrf.mxu0
    %v632 = vadd.f32 %v535, %v631
    %v633 = vpop.f32.mrf.mxu0
    %634 = vmatprep.mubr.f32.mxu0 0.0
    %635 = vmatmul.mubr.f32.gmra.mxu0 %v553
    %v636 = vpop.f32.mrf.mxu0
    %v637 = vadd.f32 %v540, %v636
    %v638 = vpop.f32.mrf.mxu0
    %639 = vdwg.mxu0
    %v640 = vmax.f32 %v622, 0.0
    %v641 = vmax.f32 %v627, 0.0
    %v642 = vmax.f32 %v632, 0.0
    %v643 = vmax.f32 %v637, 0.0
    %v644 = vld [vmem:[%s6] sm:$0xf]
    %v645 = vld [vmem:[%s7] sm:$0xf]
    %647 = vset.pattern.permute.xlu0 0
    %648 = vperm.xlu0 %647, %v645
    %v649 = vpop.permute.xlu0 %648
    %v652 = vsel %vm542, %v644, 0
    %654 = vmatprep.subr.mxu0 0.0
    %655 = vmatpush1.msra.mxu0 0.0
    %656 = vmatprep.subr.mxu0 0.0
    %657 = vmatpush1.msra.mxu0 0.0
    %658 = vmatprep.subr.mxu0 0.0
    %659 = vmatpush1.msra.mxu0 0.0
    %660 = vmatprep.subr.mxu0 0.0
    %661 = vmatpush1.msra.mxu0 0.0
    %662 = vmatprep.subr.mxu0 0.0
    %663 = vmatpush1.msra.mxu0 0.0
    %664 = vmatprep.subr.mxu0 0.0
    %665 = vmatpush1.msra.mxu0 0.0
    %666 = vmatprep.subr.mxu0 0.0
    %667 = vmatpush1.msra.mxu0 0.0
    %668 = vmatprep.subr.mxu0 0.0
    %669 = vmatpush1.msra.mxu0 0.0
    %670 = vmatprep.subr.mxu0 0.0
    %671 = vmatpush1.msra.mxu0 0.0
    %672 = vmatprep.subr.mxu0 0.0
    %673 = vmatpush1.msra.mxu0 0.0
    %674 = vmatprep.subr.mxu0 0.0
    %675 = vmatpush1.msra.mxu0 0.0
    %676 = vmatprep.subr.mxu0 0.0
    %677 = vmatpush1.msra.mxu0 0.0
    %678 = vmatprep.subr.mxu0 0.0
    %679 = vmatpush1.msra.mxu0 %v643
    %680 = vmatprep.subr.mxu0 0.0
    %681 = vmatpush1.msra.mxu0 %v642
    %682 = vmatprep.subr.mxu0 0.0
    %683 = vmatpush1.msra.mxu0 %v641
    %684 = vmatprep.subr.mxu0 0.0
    %685 = vmatpush1.msra.mxu0 %v640
    %686 = vmatprep.subr.mxu0 0.0
    %687 = vmatpush2.msra.mxu0 0.0
    %688 = vmatprep.subr.mxu0 0.0
    %689 = vmatpush2.msra.mxu0 0.0
    %690 = vmatprep.subr.mxu0 0.0
    %691 = vmatpush2.msra.mxu0 0.0
    %692 = vmatprep.subr.mxu0 0.0
    %693 = vmatpush2.msra.mxu0 0.0
    %694 = vmatprep.subr.mxu0 0.0
    %695 = vmatpush2.msra.mxu0 0.0
    %696 = vmatprep.subr.mxu0 0.0
    %697 = vmatpush2.msra.mxu0 0.0
    %698 = vmatprep.subr.mxu0 0.0
    %699 = vmatpush2.msra.mxu0 0.0
    %700 = vmatprep.subr.mxu0 0.0
    %701 = vmatpush2.msra.mxu0 0.0
    %702 = vmatprep.subr.mxu0 0.0
    %703 = vmatpush2.msra.mxu0 0.0
    %704 = vmatprep.subr.mxu0 0.0
    %705 = vmatpush2.msra.mxu0 0.0
    %706 = vmatprep.subr.mxu0 0.0
    %707 = vmatpush2.msra.mxu0 0.0
    %708 = vmatprep.subr.mxu0 0.0
    %709 = vmatpush2.msra.mxu0 0.0
    %710 = vmatprep.subr.mxu0 0.0
    %711 = vmatpush2.msra.mxu0 0.0
    %712 = vmatprep.subr.mxu0 0.0
    %713 = vmatpush2.msra.mxu0 0.0
    %714 = vmatprep.subr.mxu0 0.0
    %715 = vmatpush2.msra.mxu0 0.0
    %716 = vmatprep.subr.mxu0 0.0
    %717 = vmatpush2.msra.mxu0 0.0
    %718 = vmatprep.mubr.f32.mxu0 0.0
    %719 = vmatmul.mubr.f32.gmra.mxu0 %v652
    %v720 = vpop.f32.mrf.mxu0
    %v721 = vadd.f32 %v649, %v720
    %v722 = vpop.f32.mrf.mxu0
    %723 = vdwg.mxu0
    %724 = vxpose.xlu0.b32.start [1/16] %v721, 128
    %725 = vxpose.xlu0.b32.cont [2/16] 0.0, 128
    %726 = vxpose.xlu0.b32.cont [3/16] 0.0, 128
    %727 = vxpose.xlu0.b32.cont [4/16] 0.0, 128
    %728 = vxpose.xlu0.b32.cont [5/16] 0.0, 128
    %729 = vxpose.xlu0.b32.cont [6/16] 0.0, 128
    %730 = vxpose.xlu0.b32.cont [7/16] 0.0, 128
    %731 = vxpose.xlu0.b32.cont [8/16] 0.0, 128
    %732 = vxpose.xlu0.b32.cont [9/16] 0.0, 128
    %733 = vxpose.xlu0.b32.cont [10/16] 0.0, 128
    %734 = vxpose.xlu0.b32.cont [11/16] 0.0, 128
    %735 = vxpose.xlu0.b32.cont [12/16] 0.0, 128
    %736 = vxpose.xlu0.b32.cont [13/16] 0.0, 128
    %737 = vxpose.xlu0.b32.cont [14/16] 0.0, 128
    %738 = vxpose.xlu0.b32.cont [15/16] 0.0, 128
    %739 = vxpose.xlu0.b32.end [16/16] 0.0, 128
    %v740 = vpop.trf.xlu0
    %v741 = vpop.trf.xlu0
    %v742 = vpop.trf.xlu0
    %v743 = vpop.trf.xlu0
    %v744 = vpop.trf.xlu0
    %v745 = vpop.trf.xlu0
    %v746 = vpop.trf.xlu0
    %v747 = vpop.trf.xlu0
    %v748 = vpop.trf.xlu0
    %v749 = vpop.trf.xlu0
    %v750 = vpop.trf.xlu0
    %v751 = vpop.trf.xlu0
    %v752 = vpop.trf.xlu0
    %v753 = vpop.trf.xlu0
    %v754 = vpop.trf.xlu0
    %v755 = vpop.trf.xlu0
    %vm756 = vcmask 25600
    %757 = vst.msk [vmem:[#allocation2] sm:$0x3] %vm756, %v740
    // Predicated region
    $region34: #{tpu_custom_call.1} parent=1 // pred_check
      _
    $region35: #{tpu_custom_call.1} parent=1 // pred_check_branch
      %759 = sbr.rel (0) target = $region37
    $region36: #{tpu_custom_call.1} parent=1 // pred_region
      %s761 = ssub.s32 32, 32
      %762 = vsyncadd [#allocation3], %s761
      %s764 = sshll.u32 [#allocation2], 4
      %s765 = int_to_ptr.vmem [resolvable:$true] %s764
      %767 = dma.vmem_to_hbm [thread:$0]  %s765, 32, %s8, [#allocation3]
    $region37: #{tpu_custom_call.1} parent=1 // pred_fallthru
      _
    // Predicated region
    $region38: #{tpu_custom_call.1} parent=1 // pred_check
      _
    $region39: #{tpu_custom_call.1} parent=1 // pred_check_branch
      %769 = sbr.rel (0) target = $region41
    $region40: #{tpu_custom_call.1} parent=1 // pred_region
      %770 = dma.done [#allocation3], 32
    $region41: #{tpu_custom_call.1} parent=1 // pred_fallthru
      _
    %771 = vsyncpa [#allocation3], 1

</llo_original>
